<compile_context>
chip_gen: v5e
topology: v5e:2x2
jax: 0.10.0
libtpu: 0.0.40
codegen_flags: <defaults>
</compile_context>

<pallas_src>
import jax
import jax.numpy as jnp
from jax.experimental import pallas as pl
from jax.experimental.pallas import tpu as pltpu

# Small synthetic stand-ins for luafun constants.
RANK_SIZE = 8     # const.Rank.Size
VECTOR = 128      # CategoryEncoder default out_size
BATCH = 256       # example batch (2 tiles of 128 -> exercises the grid / pipelining)
TILE_M = 128      # batch tile: MXU-width-aligned, multiple of 8 sublanes (f32)


def skill_bias_kernel(rank_ref, w_ref, out_ref):
    # One MXU matmul per batch tile: (TILE_M, RANK_SIZE) @ (RANK_SIZE, VECTOR) -> (TILE_M, VECTOR)
    out_ref[...] = jnp.dot(
        rank_ref[...], w_ref[...], preferred_element_type=jnp.float32
    ).astype(out_ref.dtype)


def skill_bias(rank, weight, *, tile_m=TILE_M):
    """SkillBias forward.

    rank:   (B, RANK_SIZE) float32
    weight: (VECTOR, RANK_SIZE) float32  -- torch nn.Linear layout (out_features, in_features)
    returns (B, VECTOR) float32 == rank @ weight.T
    """
    b, k = rank.shape
    v = weight.shape[0]
    w_t = weight.T  # (RANK_SIZE, VECTOR): host-side, once; kernel does plain row-major matmul.

    # Batch tile: multiple of 8 (f32 sublane tiling), capped at tile_m; pad B up to it.
    tm = min(tile_m, max(8, ((b + 7) // 8) * 8))
    b_pad = pl.cdiv(b, tm) * tm
    if b_pad != b:
        rank = jnp.pad(rank, ((0, b_pad - b), (0, 0)))

    out = pl.pallas_call(
        skill_bias_kernel,
        out_shape=jax.ShapeDtypeStruct((b_pad, v), jnp.float32),
        grid=(b_pad // tm,),
        in_specs=[
            pl.BlockSpec((tm, k), lambda i: (i, 0)),        # batch tile of rank
            pl.BlockSpec((k, v), lambda i: (0, 0)),         # whole weight, resident across tiles
        ],
        out_specs=pl.BlockSpec((tm, v), lambda i: (i, 0)),  # lane-dense 128-wide output
        compiler_params=pltpu.CompilerParams(
            dimension_semantics=("parallel",),              # shard batch tiles across TCs (v7x)
        ),
    )(rank, w_t)
    return out[:b]


def skill_bias_ref(rank, weight):
    """Pure-JAX reference mirroring the PyTorch forward literally (nn.Linear, no bias)."""
    return rank @ weight.T


if __name__ == "__main__":
    key = jax.random.PRNGKey(0)
    k_r, k_w = jax.random.split(key, 2)

    # One-hot ranks like the real usage (semantics also hold for dense inputs).
    rank_idx = jax.random.randint(k_r, (BATCH,), 0, RANK_SIZE)
    rank = jax.nn.one_hot(rank_idx, RANK_SIZE, dtype=jnp.float32)          # (B, RANK_SIZE)

    # Deterministic weight in torch layout (out_features, in_features).
    w_skill = jax.random.normal(k_w, (VECTOR, RANK_SIZE), jnp.float32) * 0.05

    out = skill_bias(rank, w_skill)
    out = jax.block_until_ready(out)

    ref = skill_bias_ref(rank, w_skill)
    assert out.shape == (BATCH, VECTOR)
    assert jnp.allclose(out, ref, rtol=1e-5, atol=1e-5), "mismatch vs reference"

    # Zero-initialized weight (as in the actual PyTorch module) -> all-zero output.
    out_zero = jax.block_until_ready(skill_bias(rank, jnp.zeros_like(w_skill)))
    assert jnp.allclose(out_zero, jnp.zeros_like(out_zero)), "zero-init weight must give zeros"

    # Non-multiple-of-tile batch exercises the padding path.
    out_small = jax.block_until_ready(skill_bias(rank[:13], w_skill))
    assert jnp.allclose(out_small, ref[:13], rtol=1e-5, atol=1e-5), "padded-batch mismatch"

    print("KERNEL_OK")
</pallas_src>

<mosaic_0001>
module attributes {stable_mosaic.version = 11 : i64} {
  func.func @skill_bias_kernel(%arg0: i32, %arg1: memref<128x8xf32, #tpu.memory_space<vmem>>, %arg2: memref<8x128xf32, #tpu.memory_space<vmem>>, %arg3: memref<128x128xf32, #tpu.memory_space<vmem>>) attributes {dimension_semantics = [#tpu.dimension_semantics<parallel>], iteration_bounds = array<i64: 2>, scalar_prefetch = 0 : i64, scratch_operands = 0 : i64, tpu.core_type = #tpu.core_type<tc>, window_params = [{transform_indices = @transform_0, window_bounds = array<i64: 128, 8>}, {pipeline_mode = #tpu.pipeline_mode<synchronous>, transform_indices = @transform_1, window_bounds = array<i64: 8, 128>}, {transform_indices = @transform_2, window_bounds = array<i64: 128, 128>}]} {
    %c0 = arith.constant 0 : index
    %c0_0 = arith.constant 0 : index
    %0 = vector.load %arg1[%c0, %c0_0] : memref<128x8xf32, #tpu.memory_space<vmem>>, vector<128x8xf32>
    %c0_1 = arith.constant 0 : index
    %c0_2 = arith.constant 0 : index
    %1 = vector.load %arg2[%c0_1, %c0_2] : memref<8x128xf32, #tpu.memory_space<vmem>>, vector<8x128xf32>
    %cst = arith.constant dense<0.000000e+00> : vector<128x128xf32>
    %2 = tpu.matmul %0, %1, %cst {dimension_numbers = #tpu.dot_dimension_numbers<[1], [0], [0], [1], [0, 0, 1, 1], [], []>} : vector<128x8xf32>, vector<8x128xf32>, vector<128x128xf32> -> vector<128x128xf32>
    %c0_3 = arith.constant 0 : index
    %c0_4 = arith.constant 0 : index
    %3 = vector.load %arg3[%c0_3, %c0_4] : memref<128x128xf32, #tpu.memory_space<vmem>>, vector<128x128xf32>
    tpu.vector_store %arg3[%c0_3, %c0_4], %2 {strides = array<i32>} : memref<128x128xf32, #tpu.memory_space<vmem>>, vector<128x128xf32>,
    return
  }
  func.func @transform_0(%arg0: i32) -> (i32, i32) {
    %c0_i32 = arith.constant 0 : i32
    %c0_i32_0 = arith.constant 0 : i32
    return %arg0, %c0_i32 : i32, i32
  }
  func.func @transform_1(%arg0: i32) -> (i32, i32) {
    %c0_i32 = arith.constant 0 : i32
    %c0_i32_0 = arith.constant 0 : i32
    %c0_i32_1 = arith.constant 0 : i32
    return %c0_i32, %c0_i32_0 : i32, i32
  }
  func.func @transform_2(%arg0: i32) -> (i32, i32) {
    %c0_i32 = arith.constant 0 : i32
    %c0_i32_0 = arith.constant 0 : i32
    return %arg0, %c0_i32 : i32, i32
  }
}

</mosaic_0001>

<llo_original>
// kernel: tpu_custom_call.1
$region0: #{tpu_custom_call.1}
  #allocation0 [shape = 'u32[]', space=smem, size = 0x4, offset = 0x4, fixed_abs, tag = 'smem constant byte address 0x4 - core index']
  #allocation1 [shape = 'u32[72,128]{1,0:T(1,128)}', space=vmem, size = 0x9000, scoped, tag = 'internal scratch']
  %s0 = inlined_call_operand.vmem [shape: f32[256,8], index: 0, kind: input, shape index: {}]
  %s1 = inlined_call_operand.vmem [shape: f32[8,128], index: 1, kind: input, shape index: {}]
  %s2 = inlined_call_operand.hbm [shape: f32[256,128], index: 2, kind: output, shape index: {}]
  %s3 = sld [smem:[#allocation0]]
  $region41: #{tpu_custom_call.1} parent=0
    _
  %s5 = ssub.s32 1, %s3
  %s6 = scalar_select 0, %s5, %s3
  $region1: #{tpu_custom_call.1} parent=0
    #allocation2 [shape = 'u8[131072]{0}', space=vmem, size = 0x20000, scoped, tag = 'output window, operand 0']
    #allocation3 [shape = 's32[2]{0}', space=sflag, size = 0x8, scoped, tag = 'scoped memory for tpu_custom_call.1']
    %7 = vsyncpa [#allocation3], 0
    %s8 = scalar_lea.sflag [#allocation3], 1
    %9 = vsyncpa %s8, 0
    loop: start=0, step=1, limit=4
    $region2: #{tpu_custom_call.1} parent=1 // loop_pre_header
      _
    $region3: #{tpu_custom_call.1} parent=1 // loop_header
      %s11 = sphi 0, %s15
      %p12 = scmp.ge.s32.totalorder %s11, 4
      %s21 = sphi 0, %s23
      %s24 = sphi 0, %s21
      %s25 = sphi 0, %s24
      %s41 = sphi 0, %s25
      %s45 = sphi 0, %s45
      %s47 = sphi 0, %s45
      %s48 = sphi 0, %s47
      %s62 = sphi 0, %s48
      %s68 = sphi 0, %s70
      %s71 = sphi 0, %s68
      %s72 = sphi 0, %s71
      %s88 = sphi 0, %s72
    $region4: #{tpu_custom_call.1} parent=1 // loop_header_branch
      %14 = sbr.rel (%p12) target = $region8
    $region5: #{tpu_custom_call.1} parent=1 // loop_body
      %s16 = ssub.s32 %s11, 1
      %s17 = ssub.s32 %s11, 2
      %s18 = sadd.s32 %s11, 1
      %s19 = ssub.s32 %s11, %s18
      %p20 = scmp.eq.s32.totalorder %s19, 0
      %s22 = sadd.s32 %s21, 1
      %s23 = scalar_select %p20, %s21, %s22
      %p26 = pneg %p20
      %p27 = scmp.eq.s32.totalorder %s11, 1
      %p28 = por %p26, %p27
      %p29 = scmp.ne.s32.totalorder %s21, %s24
      %p30 = scmp.eq.s32.totalorder %s11, 0
      %p31 = por %p29, %p30
      %p32 = scmp.ne.s32.totalorder %s21, %s24
      %p33 = scmp.eq.s32.totalorder %s16, 1
      %p34 = por %p32, %p33
      %p35 = scmp.ne.s32.totalorder %s24, %s25
      %p36 = scmp.eq.s32.totalorder %s16, 0
      %p37 = por %p35, %p36
      %p38 = scmp.ne.s32.totalorder %s24, %s25
      %p39 = scmp.eq.s32.totalorder %s17, 1
      %p40 = por %p38, %p39
      %p42 = scmp.ne.s32.totalorder %s25, %s41
      %p43 = scmp.eq.s32.totalorder %s17, 0
      %p44 = por %p42, %p43
      %s46 = sadd.s32 %s45, 1
      %p49 = scmp.eq.s32.totalorder %s11, 1
      %p50 = scmp.ne.s32.totalorder %s45, %s47
      %p51 = scmp.eq.s32.totalorder %s11, 0
      %p52 = por %p50, %p51
      %p53 = scmp.ne.s32.totalorder %s45, %s47
      %p54 = scmp.eq.s32.totalorder %s16, 1
      %p55 = por %p53, %p54
      %p56 = scmp.ne.s32.totalorder %s47, %s48
      %p57 = scmp.eq.s32.totalorder %s16, 0
      %p58 = por %p56, %p57
      %p59 = scmp.ne.s32.totalorder %s47, %s48
      %p60 = scmp.eq.s32.totalorder %s17, 1
      %p61 = por %p59, %p60
      %p63 = scmp.ne.s32.totalorder %s48, %s62
      %p64 = scmp.eq.s32.totalorder %s17, 0
      %p65 = por %p63, %p64
      %s66 = ssub.s32 %s11, %s18
      %p67 = scmp.eq.s32.totalorder %s66, 0
      %s69 = sadd.s32 %s68, 1
      %s70 = scalar_select %p67, %s68, %s69
      %p73 = pneg %p67
      %p74 = scmp.eq.s32.totalorder %s11, 1
      %p75 = por %p73, %p74
      %p76 = scmp.ne.s32.totalorder %s68, %s71
      %p77 = scmp.eq.s32.totalorder %s11, 0
      %p78 = por %p76, %p77
      %p79 = scmp.ne.s32.totalorder %s68, %s71
      %p80 = scmp.eq.s32.totalorder %s16, 1
      %p81 = por %p79, %p80
      %p82 = scmp.ne.s32.totalorder %s71, %s72
      %p83 = scmp.eq.s32.totalorder %s16, 0
      %p84 = por %p82, %p83
      %p85 = scmp.ne.s32.totalorder %s71, %s72
      %p86 = scmp.eq.s32.totalorder %s17, 1
      %p87 = por %p85, %p86
      %p89 = scmp.ne.s32.totalorder %s72, %s88
      %p90 = scmp.eq.s32.totalorder %s17, 0
      %p91 = por %p89, %p90
      %p92 = scmp.le.s32.totalorder 1, %s11
      %p93 = scmp.lt.s32.totalorder %s11, 3
      %p94 = pnand %p92, %p93
      %p95 = pneg %p94
      // Predicated region
      $region9: #{tpu_custom_call.1} parent=5 // pred_check
        _
      $region10: #{tpu_custom_call.1} parent=5 // pred_check_branch
        %97 = sbr.rel (%p94) target = $region12
      $region11: #{tpu_custom_call.1} parent=5 // pred_region
        %s98 = ssub.s32 %s11, 1
        // Predicated region
        $region13: #{tpu_custom_call.1} parent=11 // pred_check
          %p99 = pneg %p58
        $region14: #{tpu_custom_call.1} parent=11 // pred_check_branch
          %101 = sbr.rel (%p99) target = $region16
        $region15: #{tpu_custom_call.1} parent=11 // pred_region
          _
        $region16: #{tpu_custom_call.1} parent=11 // pred_fallthru
          _
      $region12: #{tpu_custom_call.1} parent=5 // pred_fallthru
        _
      %p102 = scmp.lt.s32.totalorder %s11, 2
      // Predicated region
      $region17: #{tpu_custom_call.1} parent=5 // pred_check
        %p103 = pneg %p102
      $region18: #{tpu_custom_call.1} parent=5 // pred_check_branch
        %105 = sbr.rel (%p103) target = $region20
      $region19: #{tpu_custom_call.1} parent=5 // pred_region
        // Predicated region
        $region21: #{tpu_custom_call.1} parent=19 // pred_check
          %p106 = pneg %p31
        $region22: #{tpu_custom_call.1} parent=19 // pred_check_branch
          %108 = sbr.rel (%p106) target = $region24
        $region23: #{tpu_custom_call.1} parent=19 // pred_region
          %s109 = smul.u32 16, %s11
          %p110 = scmp.lt.s32.totalorder %s109, 31
          %s111 = scalar_select %p110, %s109, 31
          %s112 = smul.addr %s111, 8
          %s113 = scalar_lea.vmem %s0, %s112
          %s114 = smul.u32 16, %s11
        $region24: #{tpu_custom_call.1} parent=19 // pred_fallthru
          _
      $region20: #{tpu_custom_call.1} parent=5 // pred_fallthru
        _
      %p115 = scmp.le.s32.totalorder 1, %s11
      %p116 = scmp.lt.s32.totalorder %s11, 3
      %p117 = pnand %p115, %p116
      %p118 = pneg %p117
      // Predicated region
      $region25: #{tpu_custom_call.1} parent=5 // pred_check
        _
      $region26: #{tpu_custom_call.1} parent=5 // pred_check_branch
        %120 = sbr.rel (%p117) target = $region28
      $region27: #{tpu_custom_call.1} parent=5 // pred_region
        %s121 = ssub.s32 %s11, 1
        %s122 = smul.u32 16, %s16
        %p123 = scmp.lt.s32.totalorder %s122, 31
        %s124 = scalar_select %p123, %s122, 31
        %s125 = smul.addr %s124, 8
        %s126 = scalar_lea.vmem %s0, %s125
        %p127 = pneg %p37
        %p128 = pneg %p34
        %p129 = pneg %p58
        %p130 = pneg %p55
        %p131 = pneg %p84
        %p132 = pneg %p81
        %s133 = sand.u32 %s71, 1
        %s134 = scalar_lea.sflag [#allocation3], %s133
        %s135 = sand.u32 %s71, 1
        %s136 = smul.addr %s135, 128
        %s137 = scalar_lea.vmem [#allocation2], %s136
        %s138 = smul.u32 16, %s16
        %p139 = scmp.lt.s32.totalorder %s138, 31
        %s140 = scalar_select %p139, %s138, 31
        %s141 = smul.addr %s140, 8
        %s142 = scalar_lea.vmem %s0, %s141
        %s143 = smul.u32 16, %s16
        %s144 = smul.u32 16, %s16
        %v145 = vld [vmem:[%s142] sm:$0xff]
        %v146 = vld [vmem:[%s142 + $0x8] sm:$0xff]
        %v147 = vld [vmem:[%s142 + $0x10] sm:$0xff]
        %v148 = vld [vmem:[%s142 + $0x18] sm:$0xff]
        %v149 = vld [vmem:[%s142 + $0x20] sm:$0xff]
        %v150 = vld [vmem:[%s142 + $0x28] sm:$0xff]
        %v151 = vld [vmem:[%s142 + $0x30] sm:$0xff]
        %v152 = vld [vmem:[%s142 + $0x38] sm:$0xff]
        %v153 = vld [vmem:[%s142 + $0x40] sm:$0xff]
        %v154 = vld [vmem:[%s142 + $0x48] sm:$0xff]
        %v155 = vld [vmem:[%s142 + $0x50] sm:$0xff]
        %v156 = vld [vmem:[%s142 + $0x58] sm:$0xff]
        %v157 = vld [vmem:[%s142 + $0x60] sm:$0xff]
        %v158 = vld [vmem:[%s142 + $0x68] sm:$0xff]
        %v159 = vld [vmem:[%s142 + $0x70] sm:$0xff]
        %v160 = vld [vmem:[%s142 + $0x78] sm:$0xff]
        %v161 = vld [vmem:[%s1] sm:$0xff]
        %vm162 = vcmask 64512
        %v164 = vsel %vm162, %v145, 0
        %v167 = vsel %vm162, %v146, 0
        %v170 = vsel %vm162, %v147, 0
        %v173 = vsel %vm162, %v148, 0
        %v176 = vsel %vm162, %v149, 0
        %v179 = vsel %vm162, %v150, 0
        %v182 = vsel %vm162, %v151, 0
        %v185 = vsel %vm162, %v152, 0
        %v188 = vsel %vm162, %v153, 0
        %v191 = vsel %vm162, %v154, 0
        %v194 = vsel %vm162, %v155, 0
        %v197 = vsel %vm162, %v156, 0
        %v200 = vsel %vm162, %v157, 0
        %v203 = vsel %vm162, %v158, 0
        %v206 = vsel %vm162, %v159, 0
        %v209 = vsel %vm162, %v160, 0
        %211 = vmatpush.msra.mxu0 0.0
        %212 = vmatpush.msra.mxu0 0.0
        %213 = vmatpush.msra.mxu0 0.0
        %214 = vmatpush.msra.mxu0 0.0
        %215 = vmatpush.msra.mxu0 0.0
        %216 = vmatpush.msra.mxu0 0.0
        %217 = vmatpush.msra.mxu0 0.0
        %218 = vmatpush.msra.mxu0 0.0
        %219 = vmatpush.msra.mxu0 0.0
        %220 = vmatpush.msra.mxu0 0.0
        %221 = vmatpush.msra.mxu0 0.0
        %222 = vmatpush.msra.mxu0 0.0
        %223 = vmatpush.msra.mxu0 0.0
        %224 = vmatpush.msra.mxu0 0.0
        %225 = vmatpush.msra.mxu0 0.0
        %226 = vmatpush.msra.mxu0 %v161
        %227 = vmatmul.f32.gmra.mxu0 %v164
        %v228 = vpop.f32.mrf.mxu0
        %v229 = vadd.f32 0.0, %v228
        %230 = vmatmul.f32.gmra.mxu0 %v167
        %v231 = vpop.f32.mrf.mxu0
        %v232 = vadd.f32 0.0, %v231
        %233 = vmatmul.f32.gmra.mxu0 %v170
        %v234 = vpop.f32.mrf.mxu0
        %v235 = vadd.f32 0.0, %v234
        %236 = vmatmul.f32.gmra.mxu0 %v173
        %v237 = vpop.f32.mrf.mxu0
        %v238 = vadd.f32 0.0, %v237
        %239 = vmatmul.f32.gmra.mxu0 %v176
        %v240 = vpop.f32.mrf.mxu0
        %v241 = vadd.f32 0.0, %v240
        %242 = vmatmul.f32.gmra.mxu0 %v179
        %v243 = vpop.f32.mrf.mxu0
        %v244 = vadd.f32 0.0, %v243
        %245 = vmatmul.f32.gmra.mxu0 %v182
        %v246 = vpop.f32.mrf.mxu0
        %v247 = vadd.f32 0.0, %v246
        %248 = vmatmul.f32.gmra.mxu0 %v185
        %v249 = vpop.f32.mrf.mxu0
        %v250 = vadd.f32 0.0, %v249
        %251 = vmatmul.f32.gmra.mxu0 %v188
        %v252 = vpop.f32.mrf.mxu0
        %v253 = vadd.f32 0.0, %v252
        %254 = vmatmul.f32.gmra.mxu0 %v191
        %v255 = vpop.f32.mrf.mxu0
        %v256 = vadd.f32 0.0, %v255
        %257 = vmatmul.f32.gmra.mxu0 %v194
        %v258 = vpop.f32.mrf.mxu0
        %v259 = vadd.f32 0.0, %v258
        %260 = vmatmul.f32.gmra.mxu0 %v197
        %v261 = vpop.f32.mrf.mxu0
        %v262 = vadd.f32 0.0, %v261
        %263 = vmatmul.f32.gmra.mxu0 %v200
        %v264 = vpop.f32.mrf.mxu0
        %v265 = vadd.f32 0.0, %v264
        %266 = vmatmul.f32.gmra.mxu0 %v203
        %v267 = vpop.f32.mrf.mxu0
        %v268 = vadd.f32 0.0, %v267
        %269 = vmatmul.f32.gmra.mxu0 %v206
        %v270 = vpop.f32.mrf.mxu0
        %v271 = vadd.f32 0.0, %v270
        %272 = vmatmul.f32.gmra.mxu0 %v209
        %v273 = vpop.f32.mrf.mxu0
        %v274 = vadd.f32 0.0, %v273
        %275 = vdwg.mxu0
        %276 = vst [vmem:[%s137] sm:$0xff] %v229
        %277 = vst [vmem:[%s137 + $0x8] sm:$0xff] %v232
        %278 = vst [vmem:[%s137 + $0x10] sm:$0xff] %v235
        %279 = vst [vmem:[%s137 + $0x18] sm:$0xff] %v238
        %280 = vst [vmem:[%s137 + $0x20] sm:$0xff] %v241
        %281 = vst [vmem:[%s137 + $0x28] sm:$0xff] %v244
        %282 = vst [vmem:[%s137 + $0x30] sm:$0xff] %v247
        %283 = vst [vmem:[%s137 + $0x38] sm:$0xff] %v250
        %284 = vst [vmem:[%s137 + $0x40] sm:$0xff] %v253
        %285 = vst [vmem:[%s137 + $0x48] sm:$0xff] %v256
        %286 = vst [vmem:[%s137 + $0x50] sm:$0xff] %v259
        %287 = vst [vmem:[%s137 + $0x58] sm:$0xff] %v262
        %288 = vst [vmem:[%s137 + $0x60] sm:$0xff] %v265
        %289 = vst [vmem:[%s137 + $0x68] sm:$0xff] %v268
        %290 = vst [vmem:[%s137 + $0x70] sm:$0xff] %v271
        %291 = vst [vmem:[%s137 + $0x78] sm:$0xff] %v274
        %s292 = sand.u32 %s71, 1
        %s293 = scalar_lea.sflag [#allocation3], %s292
        %s294 = sand.u32 %s71, 1
        %s295 = smul.addr %s294, 128
        %s296 = scalar_lea.vmem [#allocation2], %s295
        // Predicated region
        $region29: #{tpu_custom_call.1} parent=27 // pred_check
          %p297 = pneg %p81
        $region30: #{tpu_custom_call.1} parent=27 // pred_check_branch
          %299 = sbr.rel (%p297) target = $region32
        $region31: #{tpu_custom_call.1} parent=27 // pred_region
          %s300 = smul.u32 16, %s16
          %302 = vsyncadd %s293, 0
          %s303 = smul.addr %s300, 8
          %s304 = scalar_lea.hbm %s2, %s303
          %s305 = sshll.u32 %s296, 4
          %s306 = int_to_ptr.vmem [resolvable:$true] %s305
          %s307 = sshll.u32 %s304, 4
          %s308 = int_to_ptr.hbm [resolvable:$true] %s307
          %313 = dma.vmem_to_hbm [thread:$0]  %s306, 2048, %s308, %s293, 128, 128, 8
        $region32: #{tpu_custom_call.1} parent=27 // pred_fallthru
          _
      $region28: #{tpu_custom_call.1} parent=5 // pred_fallthru
        _
      %p314 = scmp.le.s32.totalorder 2, %s11
      // Predicated region
      $region33: #{tpu_custom_call.1} parent=5 // pred_check
        %p315 = pneg %p314
      $region34: #{tpu_custom_call.1} parent=5 // pred_check_branch
        %317 = sbr.rel (%p315) target = $region36
      $region35: #{tpu_custom_call.1} parent=5 // pred_region
        %s318 = ssub.s32 %s11, 2
        // Predicated region
        $region37: #{tpu_custom_call.1} parent=35 // pred_check
          %p319 = pneg %p87
        $region38: #{tpu_custom_call.1} parent=35 // pred_check_branch
          %321 = sbr.rel (%p319) target = $region40
        $region39: #{tpu_custom_call.1} parent=35 // pred_region
          %s322 = sand.u32 %s72, 1
          %s323 = scalar_lea.sflag [#allocation3], %s322
          %s324 = sand.u32 %s72, 1
          %s325 = smul.addr %s324, 128
          %s326 = scalar_lea.vmem [#allocation2], %s325
          %328 = dma.done %s323, 2048
        $region40: #{tpu_custom_call.1} parent=35 // pred_fallthru
          _
      $region36: #{tpu_custom_call.1} parent=5 // pred_fallthru
        _
    $region6: #{tpu_custom_call.1} parent=1 // loop_footer
      %s15 = sadd.s32 1, %s11
    $region7: #{tpu_custom_call.1} parent=1 // loop_footer_branch
      %10 = sbr.rel target = $region3
    $region8: #{tpu_custom_call.1} parent=1 // loop_exit
      _
    %329 = vsyncpa [#allocation3], 1
    %s330 = scalar_lea.sflag [#allocation3], 1
    %331 = vsyncpa %s330, 1

</llo_original>
